<compile_context>
chip_gen: v7x
topology: tpu7x:2x2x1
jax: 0.10.0
libtpu: 0.0.40
codegen_flags: <defaults>
</compile_context>

<pallas_src>
import jax
import jax.numpy as jnp
from jax.experimental import pallas as pl
from jax.experimental.pallas import tpu as pltpu

LABEL_SMOOTHING = 0.3
DICE_EPS = 1e-7
CLS_WEIGHT = 2.0
SEG_WEIGHT = 1.0
REC_WEIGHT = 1.0
CE_CLASS_WEIGHTS = (1.0, 1.6)          # torch.tensor([1.0, 1.6]) from __init__


def _round_up(x: int, m: int) -> int:
    return (x + m - 1) // m * m


def _cdiv(a: int, b: int) -> int:
    return -(-a // b)


def _device_config():
    """(num_core_splits, vmem_limit_bytes_or_None, target_bytes_per_input_block)."""
    try:
        kind = jax.devices()[0].device_kind.lower()
    except Exception:
        kind = ""
    if "v7" in kind:
        # 2 TensorCores per chip, 64 MiB VMEM per TC -> keep live footprint well under.
        return 2, 48 * 1024 * 1024, 2 * 1024 * 1024
    if "v6" in kind or "v5e" in kind or ("v5" in kind and "lite" in kind):
        # Single TC, 128 MiB physical VMEM: raise the scoped limit and use big blocks.
        return 1, 64 * 1024 * 1024, 2 * 1024 * 1024
    # Unknown / older generation: stay inside the default scoped VMEM limit.
    return 1, None, 1 * 1024 * 1024


def _plan_stream(n_elems: int):
    """Pick a lane width (multiple of 128) dividing n_elems; rare fallback pads to 128."""
    for lanes in (1024, 512, 256, 128):
        if n_elems % lanes == 0:
            return lanes, 0
    padded = _round_up(n_elems, 128)
    return 128, padded - n_elems


def _to_slab(x, lanes: int, pad_elems: int):
    flat = x.reshape(-1)
    if pad_elems:
        # TODO(synk): full-copy fallback, only for element counts not divisible by 128.
        flat = jnp.pad(flat, (0, pad_elems))
    return flat.reshape(-1, lanes)


def _tile_rows(rows: int, lanes: int, target_block_bytes: int) -> int:
    tr = max(8, (target_block_bytes // (lanes * 4)) // 8 * 8)
    if rows < 8:
        return rows               # single full-extent block (legal: equals the array dim)
    return min(tr, (rows // 8) * 8)


def _build_kernel(tiles_per_core, seg_cfg, rec_cfg):
    tr_s, ln_s, n_s, mask_s = seg_cfg   # (tile_rows, lanes, true_elem_count, need_mask)
    tr_r, ln_r, n_r, mask_r = rec_cfg

    def fold(q):
        # (TILE_R, LANES) -> (8, LANES): sublane-group sum (pure VALU, layout-preserving).
        r, l = q.shape
        if r > 8 and r % 8 == 0:
            return q.reshape(r // 8, 8, l).sum(axis=0)
        return q

    def valid_mask(tr, lanes, n_valid):
        # Logical (unclamped) global element index of every position in this tile.
        blk = pl.program_id(0) * tiles_per_core + pl.program_id(1)
        ridx = jax.lax.broadcasted_iota(jnp.int32, (tr, lanes), 0)
        lidx = jax.lax.broadcasted_iota(jnp.int32, (tr, lanes), 1)
        return (blk * tr + ridx) * lanes + lidx < n_valid

    def kernel(sx_ref, sy_ref, ra_ref, rb_ref, out_ref,
               inter_acc, psum_acc, ysum_acc, bce_acc, l1_acc):
        step = pl.program_id(1)

        @pl.when(step == 0)
        def _init():
            inter_acc[...] = jnp.zeros_like(inter_acc)
            psum_acc[...] = jnp.zeros_like(psum_acc)
            ysum_acc[...] = jnp.zeros_like(ysum_acc)
            bce_acc[...] = jnp.zeros_like(bce_acc)
            l1_acc[...] = jnp.zeros_like(l1_acc)

        # ---- seg stream: sigmoid (for Dice) + BCE-with-logits, CSE'd transcendentals ----
        x = sx_ref[...].astype(jnp.float32)
        y = sy_ref[...].astype(jnp.float32)
        t = jnp.exp(-jnp.abs(x))                                # feeds sigmoid AND softplus
        softplus = jnp.log(1.0 + t)                             # log(1 + exp(-|x|))
        p = jnp.where(x >= 0.0, 1.0, t) * pl.reciprocal(1.0 + t, approx=True)   # sigmoid(x)
        py = p * y
        bce = jnp.maximum(x, 0.0) - x * y + softplus
        if mask_s:
            m = valid_mask(tr_s, ln_s, n_s)
            py = jnp.where(m, py, 0.0)
            p = jnp.where(m, p, 0.0)
            y = jnp.where(m, y, 0.0)
            bce = jnp.where(m, bce, 0.0)
        inter_acc[...] += fold(py)
        psum_acc[...] += fold(p)
        ysum_acc[...] += fold(y)
        bce_acc[...] += fold(bce)

        # ---- rec stream: L1 partial sum ----
        a = ra_ref[...].astype(jnp.float32)
        b = rb_ref[...].astype(jnp.float32)
        l1 = jnp.abs(a - b)
        if mask_r:
            l1 = jnp.where(valid_mask(tr_r, ln_r, n_r), l1, 0.0)
        l1_acc[...] += fold(l1)

        @pl.when(step == pl.num_programs(1) - 1)
        def _finalize():
            sums = (jnp.sum(inter_acc[...]), jnp.sum(psum_acc[...]),
                    jnp.sum(ysum_acc[...]), jnp.sum(bce_acc[...]),
                    jnp.sum(l1_acc[...]))
            row = jax.lax.broadcasted_iota(jnp.int32, (8, 128), 0)
            block = jnp.zeros((8, 128), jnp.float32)
            for r, s in enumerate(sums):
                block = jnp.where(row == r, s, block)
            out_ref[...] = block

    return kernel


def _seg_rec_partial_sums(seg_pred, seg_gt, rec_pred, rec_gt):
    """Returns (inter, psum, ysum, bce_sum, l1_sum) as f32 scalars."""
    num_cores, vmem_limit, block_bytes = _device_config()

    n_seg = seg_pred.size
    n_rec = rec_pred.size
    assert seg_gt.size == n_seg and rec_gt.size == n_rec

    ln_s, pad_s = _plan_stream(n_seg)
    ln_r, pad_r = _plan_stream(n_rec)

    sx = _to_slab(seg_pred, ln_s, pad_s)
    sy = _to_slab(seg_gt, ln_s, pad_s)
    ra = _to_slab(rec_pred, ln_r, pad_r)
    rb = _to_slab(rec_gt, ln_r, pad_r)

    rows_s, rows_r = sx.shape[0], ra.shape[0]
    tr_s = _tile_rows(rows_s, ln_s, block_bytes)
    tr_r = _tile_rows(rows_r, ln_r, block_bytes)

    nb_s = _cdiv(rows_s, tr_s)
    nb_r = _cdiv(rows_r, tr_r)
    tpc = _cdiv(max(nb_s, nb_r), num_cores)          # grid steps per core

    # Static: does this stream need in-kernel masking (ragged rows / lane tail / surplus
    # grid steps that revisit a clamped block)?
    mask_s = (rows_s * ln_s != n_seg) or (rows_s % tr_s != 0) or (nb_s != num_cores * tpc)
    mask_r = (rows_r * ln_r != n_rec) or (rows_r % tr_r != 0) or (nb_r != num_cores * tpc)

    def clamped_map(n_blocks):
        need_clamp = (num_cores * tpc) > n_blocks
        last = n_blocks - 1

        def idx_map(c, i):
            b = c * tpc + i
            if need_clamp:
                b = jnp.minimum(b, last)   # revisited block is fully masked in-kernel
            return (b, 0)
        return idx_map

    acc_rows_s = 8 if (tr_s >= 8 and tr_s % 8 == 0) else tr_s
    acc_rows_r = 8 if (tr_r >= 8 and tr_r % 8 == 0) else tr_r

    kernel = _build_kernel(tpc,
                           (tr_s, ln_s, n_seg, mask_s),
                           (tr_r, ln_r, n_rec, mask_r))

    out = pl.pallas_call(
        kernel,
        out_shape=jax.ShapeDtypeStruct((num_cores * 8, 128), jnp.float32),
        grid=(num_cores, tpc),
        in_specs=[pl.BlockSpec((tr_s, ln_s), clamped_map(nb_s)),
                  pl.BlockSpec((tr_s, ln_s), clamped_map(nb_s)),
                  pl.BlockSpec((tr_r, ln_r), clamped_map(nb_r)),
                  pl.BlockSpec((tr_r, ln_r), clamped_map(nb_r))],
        out_specs=pl.BlockSpec((8, 128), lambda c, i: (c, 0)),
        scratch_shapes=[pltpu.VMEM((acc_rows_s, ln_s), jnp.float32)] * 4
                     + [pltpu.VMEM((acc_rows_r, ln_r), jnp.float32)],
        compiler_params=pltpu.CompilerParams(
            dimension_semantics=("parallel", "arbitrary"),
            vmem_limit_bytes=vmem_limit),
    )(sx, sy, ra, rb)

    # Combine per-core partial rows: row r, lane 0 of each core's (8,128) block.
    partials = out.reshape(num_cores, 8, 128)[:, :5, 0].sum(axis=0)
    return partials[0], partials[1], partials[2], partials[3], partials[4]


def _cls_loss(cls_pred, cls_gt):
    # Weighted, label-smoothed cross entropy (PyTorch semantics), in plain JAX.
    c = cls_pred.shape[1]
    w = jnp.asarray(CE_CLASS_WEIGHTS, jnp.float32)
    logp = jax.nn.log_softmax(cls_pred.astype(jnp.float32), axis=1)
    oh = jax.nn.one_hot(cls_gt, c, dtype=jnp.float32)
    w_row = (oh * w[None, :]).sum(axis=1)                       # w_{y_n}
    nll = (w_row * -(oh * logp).sum(axis=1)).sum() / w_row.sum()
    smooth = (-(logp * w[None, :]).sum(axis=1)).sum() / w_row.sum()
    return (1.0 - LABEL_SMOOTHING) * nll + (LABEL_SMOOTHING / c) * smooth


def uptask_loss(cls_pred, seg_pred, rec_pred, cls_gt, seg_gt, rec_gt):
    """Uptask_Loss(name='Up_SMART_Net').forward"""
    l_cls = _cls_loss(cls_pred, cls_gt)

    inter, psum, ysum, bce_sum, l1_sum = _seg_rec_partial_sums(
        seg_pred, seg_gt, rec_pred, rec_gt)

    card = psum + ysum
    dice_score = (2.0 * inter) / jnp.maximum(card, DICE_EPS)
    dice_loss = (1.0 - dice_score) * (ysum > 0).astype(jnp.float32)
    l_seg = dice_loss + bce_sum / float(seg_pred.size)
    l_rec = l1_sum / float(rec_pred.size)

    total = CLS_WEIGHT * l_cls + SEG_WEIGHT * l_seg + REC_WEIGHT * l_rec
    parts = {"CLS_Loss": CLS_WEIGHT * l_cls,
             "SEG_Loss": SEG_WEIGHT * l_seg,
             "REC_Loss": REC_WEIGHT * l_rec}
    return total, parts


# ---------------------------------------------------------------------------
# Pure-JAX reference (same math) for a sanity check.
# ---------------------------------------------------------------------------
def _ref_total(cls_pred, seg_pred, rec_pred, cls_gt, seg_gt, rec_gt):
    c = cls_pred.shape[1]
    w = jnp.asarray(CE_CLASS_WEIGHTS, jnp.float32)
    logp = jax.nn.log_softmax(cls_pred.astype(jnp.float32), axis=1)
    oh = jax.nn.one_hot(cls_gt, c, dtype=jnp.float32)
    w_row = (oh * w[None, :]).sum(1)
    nll = (w_row * -(oh * logp).sum(1)).sum() / w_row.sum()
    smooth = (-(logp * w[None, :]).sum(1)).sum() / w_row.sum()
    l_cls = (1 - LABEL_SMOOTHING) * nll + (LABEL_SMOOTHING / c) * smooth

    n = seg_pred.shape[0]
    x = seg_pred.reshape(n, -1).astype(jnp.float32)
    y = seg_gt.reshape(n, -1).astype(jnp.float32)
    p = jax.nn.sigmoid(x)
    dice = (2.0 * (p * y).sum()) / jnp.maximum((p + y).sum(), DICE_EPS)
    dice_l = (1.0 - dice) * (y.sum() > 0).astype(jnp.float32)
    bce = (jnp.maximum(x, 0.0) - x * y + jnp.log1p(jnp.exp(-jnp.abs(x)))).mean()
    l_seg = dice_l + bce

    l_rec = jnp.abs(rec_pred.astype(jnp.float32) - rec_gt.astype(jnp.float32)).mean()
    return CLS_WEIGHT * l_cls + SEG_WEIGHT * l_seg + REC_WEIGHT * l_rec


if __name__ == "__main__":
    key = jax.random.PRNGKey(0)
    k1, k2, k3, k4, k5, k6 = jax.random.split(key, 6)

    N, H, W = 2, 16, 16
    cls_pred = jax.random.normal(k1, (N, 2), jnp.float32)            # (N, 2) logits
    cls_gt = jax.random.randint(k2, (N,), 0, 2, jnp.int32)           # (N,) labels
    seg_pred = jax.random.normal(k3, (N, 1, H, W), jnp.float32)      # NCHW logits
    seg_gt = jax.random.bernoulli(k4, 0.3, (N, 1, H, W)).astype(jnp.float32)
    rec_pred = jax.random.normal(k5, (N, 1, H, W), jnp.float32)
    rec_gt = jax.random.normal(k6, (N, 1, H, W), jnp.float32)

    total, parts = jax.jit(uptask_loss)(cls_pred, seg_pred, rec_pred,
                                        cls_gt, seg_gt, rec_gt)
    total = jax.block_until_ready(total)
    _ = jax.block_until_ready(parts)

    ref = jax.block_until_ready(
        _ref_total(cls_pred, seg_pred, rec_pred, cls_gt, seg_gt, rec_gt))
    err = abs(float(total) - float(ref))
    assert err < 5e-3 * max(1.0, abs(float(ref))), (float(total), float(ref))

    print("KERNEL_OK")
</pallas_src>

<mosaic_0001>
module attributes {stable_mosaic.version = 11 : i64} {
  func.func @kernel(%arg0: i32, %arg1: i32, %arg2: memref<1x512xf32, #tpu.memory_space<vmem>>, %arg3: memref<1x512xf32, #tpu.memory_space<vmem>>, %arg4: memref<1x512xf32, #tpu.memory_space<vmem>>, %arg5: memref<1x512xf32, #tpu.memory_space<vmem>>, %arg6: memref<8x128xf32, #tpu.memory_space<vmem>>, %arg7: memref<1x512xf32, #tpu.memory_space<vmem>>, %arg8: memref<1x512xf32, #tpu.memory_space<vmem>>, %arg9: memref<1x512xf32, #tpu.memory_space<vmem>>, %arg10: memref<1x512xf32, #tpu.memory_space<vmem>>, %arg11: memref<1x512xf32, #tpu.memory_space<vmem>>) attributes {dimension_semantics = [#tpu.dimension_semantics<parallel>, #tpu.dimension_semantics<arbitrary>], iteration_bounds = array<i64: 1, 1>, scalar_prefetch = 0 : i64, scratch_operands = 5 : i64, tpu.core_type = #tpu.core_type<tc>, window_params = [{transform_indices = @transform_0, window_bounds = array<i64: 1, 512>}, {transform_indices = @transform_1, window_bounds = array<i64: 1, 512>}, {transform_indices = @transform_2, window_bounds = array<i64: 1, 512>}, {transform_indices = @transform_3, window_bounds = array<i64: 1, 512>}, {transform_indices = @transform_4, window_bounds = array<i64: 8, 128>}]} {
    %c0_i32 = arith.constant 0 : i32
    %0 = arith.cmpi eq, %arg1, %c0_i32 : i32
    %1 = arith.extui %0 : i1 to i32
    %c0_i32_0 = arith.constant 0 : i32
    %2 = arith.cmpi ne, %1, %c0_i32_0 : i32
    scf.if %2 {
      %cst_35 = arith.constant 0.000000e+00 : f32
      %48 = vector.broadcast %cst_35 : f32 to vector<1x512xf32>
      %c0_36 = arith.constant 0 : index
      %c0_37 = arith.constant 0 : index
      %49 = vector.load %arg7[%c0_36, %c0_37] : memref<1x512xf32, #tpu.memory_space<vmem>>, vector<1x512xf32>
      tpu.vector_store %arg7[%c0_36, %c0_37], %48 {strides = array<i32>} : memref<1x512xf32, #tpu.memory_space<vmem>>, vector<1x512xf32>,
      %cst_38 = arith.constant 0.000000e+00 : f32
      %50 = vector.broadcast %cst_38 : f32 to vector<1x512xf32>
      %c0_39 = arith.constant 0 : index
      %c0_40 = arith.constant 0 : index
      %51 = vector.load %arg8[%c0_39, %c0_40] : memref<1x512xf32, #tpu.memory_space<vmem>>, vector<1x512xf32>
      tpu.vector_store %arg8[%c0_39, %c0_40], %50 {strides = array<i32>} : memref<1x512xf32, #tpu.memory_space<vmem>>, vector<1x512xf32>,
      %cst_41 = arith.constant 0.000000e+00 : f32
      %52 = vector.broadcast %cst_41 : f32 to vector<1x512xf32>
      %c0_42 = arith.constant 0 : index
      %c0_43 = arith.constant 0 : index
      %53 = vector.load %arg9[%c0_42, %c0_43] : memref<1x512xf32, #tpu.memory_space<vmem>>, vector<1x512xf32>
      tpu.vector_store %arg9[%c0_42, %c0_43], %52 {strides = array<i32>} : memref<1x512xf32, #tpu.memory_space<vmem>>, vector<1x512xf32>,
      %cst_44 = arith.constant 0.000000e+00 : f32
      %54 = vector.broadcast %cst_44 : f32 to vector<1x512xf32>
      %c0_45 = arith.constant 0 : index
      %c0_46 = arith.constant 0 : index
      %55 = vector.load %arg10[%c0_45, %c0_46] : memref<1x512xf32, #tpu.memory_space<vmem>>, vector<1x512xf32>
      tpu.vector_store %arg10[%c0_45, %c0_46], %54 {strides = array<i32>} : memref<1x512xf32, #tpu.memory_space<vmem>>, vector<1x512xf32>,
      %cst_47 = arith.constant 0.000000e+00 : f32
      %56 = vector.broadcast %cst_47 : f32 to vector<1x512xf32>
      %c0_48 = arith.constant 0 : index
      %c0_49 = arith.constant 0 : index
      %57 = vector.load %arg11[%c0_48, %c0_49] : memref<1x512xf32, #tpu.memory_space<vmem>>, vector<1x512xf32>
      tpu.vector_store %arg11[%c0_48, %c0_49], %56 {strides = array<i32>} : memref<1x512xf32, #tpu.memory_space<vmem>>, vector<1x512xf32>,
    } else {
    }
    %c0 = arith.constant 0 : index
    %c0_1 = arith.constant 0 : index
    %3 = vector.load %arg2[%c0, %c0_1] : memref<1x512xf32, #tpu.memory_space<vmem>>, vector<1x512xf32>
    %c0_2 = arith.constant 0 : index
    %c0_3 = arith.constant 0 : index
    %4 = vector.load %arg3[%c0_2, %c0_3] : memref<1x512xf32, #tpu.memory_space<vmem>>, vector<1x512xf32>
    %5 = math.absf %3 : vector<1x512xf32>
    %cst = arith.constant 0.000000e+00 : f32
    %6 = vector.broadcast %cst : f32 to vector<1x512xf32>
    %7 = arith.subf %6, %5 : vector<1x512xf32>
    %8 = math.exp %7 : vector<1x512xf32>
    %cst_4 = arith.constant 1.000000e+00 : f32
    %9 = vector.broadcast %cst_4 : f32 to vector<1x512xf32>
    %10 = arith.addf %9, %8 : vector<1x512xf32>
    %11 = math.log %10 : vector<1x512xf32>
    %cst_5 = arith.constant 0.000000e+00 : f32
    %12 = vector.broadcast %cst_5 : f32 to vector<1x512xf32>
    %13 = arith.cmpf oge, %3, %12 : vector<1x512xf32>
    %cst_6 = arith.constant 1.000000e+00 : f32
    %14 = vector.broadcast %cst_6 : f32 to vector<1x512xf32>
    %15 = arith.select %13, %14, %8 : vector<1x512xi1>, vector<1x512xf32>
    %cst_7 = arith.constant 1.000000e+00 : f32
    %16 = vector.broadcast %cst_7 : f32 to vector<1x512xf32>
    %17 = arith.addf %16, %8 : vector<1x512xf32>
    %18 = tpu.reciprocal %17 {approx = true} : vector<1x512xf32> -> vector<1x512xf32>
    %19 = arith.mulf %15, %18 : vector<1x512xf32>
    %20 = arith.mulf %19, %4 : vector<1x512xf32>
    %cst_8 = arith.constant 0.000000e+00 : f32
    %21 = vector.broadcast %cst_8 : f32 to vector<1x512xf32>
    %22 = arith.maximumf %3, %21 : vector<1x512xf32>
    %23 = arith.mulf %3, %4 : vector<1x512xf32>
    %24 = arith.subf %22, %23 : vector<1x512xf32>
    %25 = arith.addf %24, %11 : vector<1x512xf32>
    %c0_9 = arith.constant 0 : index
    %c0_10 = arith.constant 0 : index
    %26 = vector.load %arg7[%c0_9, %c0_10] : memref<1x512xf32, #tpu.memory_space<vmem>>, vector<1x512xf32>
    %27 = arith.addf %26, %20 : vector<1x512xf32>
    %c0_11 = arith.constant 0 : index
    %c0_12 = arith.constant 0 : index
    %28 = vector.load %arg7[%c0_11, %c0_12] : memref<1x512xf32, #tpu.memory_space<vmem>>, vector<1x512xf32>
    tpu.vector_store %arg7[%c0_11, %c0_12], %27 {strides = array<i32>} : memref<1x512xf32, #tpu.memory_space<vmem>>, vector<1x512xf32>,
    %c0_13 = arith.constant 0 : index
    %c0_14 = arith.constant 0 : index
    %29 = vector.load %arg8[%c0_13, %c0_14] : memref<1x512xf32, #tpu.memory_space<vmem>>, vector<1x512xf32>
    %30 = arith.addf %29, %19 : vector<1x512xf32>
    %c0_15 = arith.constant 0 : index
    %c0_16 = arith.constant 0 : index
    %31 = vector.load %arg8[%c0_15, %c0_16] : memref<1x512xf32, #tpu.memory_space<vmem>>, vector<1x512xf32>
    tpu.vector_store %arg8[%c0_15, %c0_16], %30 {strides = array<i32>} : memref<1x512xf32, #tpu.memory_space<vmem>>, vector<1x512xf32>,
    %c0_17 = arith.constant 0 : index
    %c0_18 = arith.constant 0 : index
    %32 = vector.load %arg9[%c0_17, %c0_18] : memref<1x512xf32, #tpu.memory_space<vmem>>, vector<1x512xf32>
    %33 = arith.addf %32, %4 : vector<1x512xf32>
    %c0_19 = arith.constant 0 : index
    %c0_20 = arith.constant 0 : index
    %34 = vector.load %arg9[%c0_19, %c0_20] : memref<1x512xf32, #tpu.memory_space<vmem>>, vector<1x512xf32>
    tpu.vector_store %arg9[%c0_19, %c0_20], %33 {strides = array<i32>} : memref<1x512xf32, #tpu.memory_space<vmem>>, vector<1x512xf32>,
    %c0_21 = arith.constant 0 : index
    %c0_22 = arith.constant 0 : index
    %35 = vector.load %arg10[%c0_21, %c0_22] : memref<1x512xf32, #tpu.memory_space<vmem>>, vector<1x512xf32>
    %36 = arith.addf %35, %25 : vector<1x512xf32>
    %c0_23 = arith.constant 0 : index
    %c0_24 = arith.constant 0 : index
    %37 = vector.load %arg10[%c0_23, %c0_24] : memref<1x512xf32, #tpu.memory_space<vmem>>, vector<1x512xf32>
    tpu.vector_store %arg10[%c0_23, %c0_24], %36 {strides = array<i32>} : memref<1x512xf32, #tpu.memory_space<vmem>>, vector<1x512xf32>,
    %c0_25 = arith.constant 0 : index
    %c0_26 = arith.constant 0 : index
    %38 = vector.load %arg4[%c0_25, %c0_26] : memref<1x512xf32, #tpu.memory_space<vmem>>, vector<1x512xf32>
    %c0_27 = arith.constant 0 : index
    %c0_28 = arith.constant 0 : index
    %39 = vector.load %arg5[%c0_27, %c0_28] : memref<1x512xf32, #tpu.memory_space<vmem>>, vector<1x512xf32>
    %40 = arith.subf %38, %39 : vector<1x512xf32>
    %41 = math.absf %40 : vector<1x512xf32>
    %c0_29 = arith.constant 0 : index
    %c0_30 = arith.constant 0 : index
    %42 = vector.load %arg11[%c0_29, %c0_30] : memref<1x512xf32, #tpu.memory_space<vmem>>, vector<1x512xf32>
    %43 = arith.addf %42, %41 : vector<1x512xf32>
    %c0_31 = arith.constant 0 : index
    %c0_32 = arith.constant 0 : index
    %44 = vector.load %arg11[%c0_31, %c0_32] : memref<1x512xf32, #tpu.memory_space<vmem>>, vector<1x512xf32>
    tpu.vector_store %arg11[%c0_31, %c0_32], %43 {strides = array<i32>} : memref<1x512xf32, #tpu.memory_space<vmem>>, vector<1x512xf32>,
    %c0_i32_33 = arith.constant 0 : i32
    %45 = arith.cmpi eq, %arg1, %c0_i32_33 : i32
    %46 = arith.extui %45 : i1 to i32
    %c0_i32_34 = arith.constant 0 : i32
    %47 = arith.cmpi ne, %46, %c0_i32_34 : i32
    scf.if %47 {
      %c0_35 = arith.constant 0 : index
      %c0_36 = arith.constant 0 : index
      %48 = vector.load %arg7[%c0_35, %c0_36] : memref<1x512xf32, #tpu.memory_space<vmem>>, vector<1x512xf32>
      %49 = vector.shape_cast %48 : vector<1x512xf32> to vector<1x1x512xf32>
      %cst_37 = arith.constant dense<0.000000e+00> : vector<1xf32>
      %50 = vector.multi_reduction <add>, %49, %cst_37 [1, 2] : vector<1x1x512xf32> to vector<1xf32>
      %51 = vector.shape_cast %50 : vector<1xf32> to vector<1x1x1xf32>
      %52 = vector.extract %51[0, 0, 0] : f32 from vector<1x1x1xf32>
      %c0_38 = arith.constant 0 : index
      %c0_39 = arith.constant 0 : index
      %53 = vector.load %arg8[%c0_38, %c0_39] : memref<1x512xf32, #tpu.memory_space<vmem>>, vector<1x512xf32>
      %54 = vector.shape_cast %53 : vector<1x512xf32> to vector<1x1x512xf32>
      %cst_40 = arith.constant dense<0.000000e+00> : vector<1xf32>
      %55 = vector.multi_reduction <add>, %54, %cst_40 [1, 2] : vector<1x1x512xf32> to vector<1xf32>
      %56 = vector.shape_cast %55 : vector<1xf32> to vector<1x1x1xf32>
      %57 = vector.extract %56[0, 0, 0] : f32 from vector<1x1x1xf32>
      %c0_41 = arith.constant 0 : index
      %c0_42 = arith.constant 0 : index
      %58 = vector.load %arg9[%c0_41, %c0_42] : memref<1x512xf32, #tpu.memory_space<vmem>>, vector<1x512xf32>
      %59 = vector.shape_cast %58 : vector<1x512xf32> to vector<1x1x512xf32>
      %cst_43 = arith.constant dense<0.000000e+00> : vector<1xf32>
      %60 = vector.multi_reduction <add>, %59, %cst_43 [1, 2] : vector<1x1x512xf32> to vector<1xf32>
      %61 = vector.shape_cast %60 : vector<1xf32> to vector<1x1x1xf32>
      %62 = vector.extract %61[0, 0, 0] : f32 from vector<1x1x1xf32>
      %c0_44 = arith.constant 0 : index
      %c0_45 = arith.constant 0 : index
      %63 = vector.load %arg10[%c0_44, %c0_45] : memref<1x512xf32, #tpu.memory_space<vmem>>, vector<1x512xf32>
      %64 = vector.shape_cast %63 : vector<1x512xf32> to vector<1x1x512xf32>
      %cst_46 = arith.constant dense<0.000000e+00> : vector<1xf32>
      %65 = vector.multi_reduction <add>, %64, %cst_46 [1, 2] : vector<1x1x512xf32> to vector<1xf32>
      %66 = vector.shape_cast %65 : vector<1xf32> to vector<1x1x1xf32>
      %67 = vector.extract %66[0, 0, 0] : f32 from vector<1x1x1xf32>
      %c0_47 = arith.constant 0 : index
      %c0_48 = arith.constant 0 : index
      %68 = vector.load %arg11[%c0_47, %c0_48] : memref<1x512xf32, #tpu.memory_space<vmem>>, vector<1x512xf32>
      %69 = vector.shape_cast %68 : vector<1x512xf32> to vector<1x1x512xf32>
      %cst_49 = arith.constant dense<0.000000e+00> : vector<1xf32>
      %70 = vector.multi_reduction <add>, %69, %cst_49 [1, 2] : vector<1x1x512xf32> to vector<1xf32>
      %71 = vector.shape_cast %70 : vector<1xf32> to vector<1x1x1xf32>
      %72 = vector.extract %71[0, 0, 0] : f32 from vector<1x1x1xf32>
      %73 = tpu.iota {dimensions = array<i32: 0>} : vector<8x128xi32>
      %cst_50 = arith.constant 0.000000e+00 : f32
      %74 = vector.broadcast %cst_50 : f32 to vector<8x128xf32>
      %c0_i32_51 = arith.constant 0 : i32
      %75 = vector.broadcast %c0_i32_51 : i32 to vector<8x128xi32>
      %76 = arith.cmpi eq, %73, %75 : vector<8x128xi32>
      %77 = vector.broadcast %52 : f32 to vector<8x128xf32>
      %78 = arith.select %76, %77, %74 : vector<8x128xi1>, vector<8x128xf32>
      %c1_i32 = arith.constant 1 : i32
      %79 = vector.broadcast %c1_i32 : i32 to vector<8x128xi32>
      %80 = arith.cmpi eq, %73, %79 : vector<8x128xi32>
      %81 = vector.broadcast %57 : f32 to vector<8x128xf32>
      %82 = arith.select %80, %81, %78 : vector<8x128xi1>, vector<8x128xf32>
      %c2_i32 = arith.constant 2 : i32
      %83 = vector.broadcast %c2_i32 : i32 to vector<8x128xi32>
      %84 = arith.cmpi eq, %73, %83 : vector<8x128xi32>
      %85 = vector.broadcast %62 : f32 to vector<8x128xf32>
      %86 = arith.select %84, %85, %82 : vector<8x128xi1>, vector<8x128xf32>
      %c3_i32 = arith.constant 3 : i32
      %87 = vector.broadcast %c3_i32 : i32 to vector<8x128xi32>
      %88 = arith.cmpi eq, %73, %87 : vector<8x128xi32>
      %89 = vector.broadcast %67 : f32 to vector<8x128xf32>
      %90 = arith.select %88, %89, %86 : vector<8x128xi1>, vector<8x128xf32>
      %c4_i32 = arith.constant 4 : i32
      %91 = vector.broadcast %c4_i32 : i32 to vector<8x128xi32>
      %92 = arith.cmpi eq, %73, %91 : vector<8x128xi32>
      %93 = vector.broadcast %72 : f32 to vector<8x128xf32>
      %94 = arith.select %92, %93, %90 : vector<8x128xi1>, vector<8x128xf32>
      %c0_52 = arith.constant 0 : index
      %c0_53 = arith.constant 0 : index
      %95 = vector.load %arg6[%c0_52, %c0_53] : memref<8x128xf32, #tpu.memory_space<vmem>>, vector<8x128xf32>
      tpu.vector_store %arg6[%c0_52, %c0_53], %94 {strides = array<i32>} : memref<8x128xf32, #tpu.memory_space<vmem>>, vector<8x128xf32>,
    } else {
    }
    return
  }
  func.func @transform_0(%arg0: i32, %arg1: i32) -> (i32, i32) {
    %c1_i32 = arith.constant 1 : i32
    %0 = arith.muli %arg0, %c1_i32 : i32
    %1 = arith.addi %0, %arg1 : i32
    %c0_i32 = arith.constant 0 : i32
    %c0_i32_0 = arith.constant 0 : i32
    return %1, %c0_i32 : i32, i32
  }
  func.func @transform_1(%arg0: i32, %arg1: i32) -> (i32, i32) {
    %c1_i32 = arith.constant 1 : i32
    %0 = arith.muli %arg0, %c1_i32 : i32
    %1 = arith.addi %0, %arg1 : i32
    %c0_i32 = arith.constant 0 : i32
    %c0_i32_0 = arith.constant 0 : i32
    return %1, %c0_i32 : i32, i32
  }
  func.func @transform_2(%arg0: i32, %arg1: i32) -> (i32, i32) {
    %c1_i32 = arith.constant 1 : i32
    %0 = arith.muli %arg0, %c1_i32 : i32
    %1 = arith.addi %0, %arg1 : i32
    %c0_i32 = arith.constant 0 : i32
    %c0_i32_0 = arith.constant 0 : i32
    return %1, %c0_i32 : i32, i32
  }
  func.func @transform_3(%arg0: i32, %arg1: i32) -> (i32, i32) {
    %c1_i32 = arith.constant 1 : i32
    %0 = arith.muli %arg0, %c1_i32 : i32
    %1 = arith.addi %0, %arg1 : i32
    %c0_i32 = arith.constant 0 : i32
    %c0_i32_0 = arith.constant 0 : i32
    return %1, %c0_i32 : i32, i32
  }
  func.func @transform_4(%arg0: i32, %arg1: i32) -> (i32, i32) {
    %c0_i32 = arith.constant 0 : i32
    %c0_i32_0 = arith.constant 0 : i32
    return %arg0, %c0_i32 : i32, i32
  }
}

</mosaic_0001>

<llo_original>
// kernel: uptask_loss.1
$region0: #{uptask_loss.1}
  #allocation0 [shape = 'u32[]', space=smem, size = 0x4, offset = 0x4, fixed_abs, tag = 'smem constant byte address 0x4 - core index']
  #allocation1 [shape = 'u32[144,128]{1,0:T(1,128)}', space=vmem, size = 0x12000, scoped, tag = 'internal scratch']
  #allocation2 [shape = 'f32[1,512]{1,0:T(1,128)}', space=vmem, size = 0x800, scoped, tag = 'scratch operand']
  #allocation3 [shape = 'f32[1,512]{1,0:T(1,128)}', space=vmem, size = 0x800, scoped, tag = 'scratch operand']
  #allocation4 [shape = 'f32[1,512]{1,0:T(1,128)}', space=vmem, size = 0x800, scoped, tag = 'scratch operand']
  #allocation5 [shape = 'f32[1,512]{1,0:T(1,128)}', space=vmem, size = 0x800, scoped, tag = 'scratch operand']
  #allocation6 [shape = 'f32[1,512]{1,0:T(1,128)}', space=vmem, size = 0x800, scoped, tag = 'scratch operand']
  %s0 = inlined_call_operand.vmem [shape: f32[1,512], index: 0, kind: input, shape index: {}]
  %s1 = inlined_call_operand.vmem [shape: f32[1,512], index: 1, kind: input, shape index: {}]
  %s2 = inlined_call_operand.vmem [shape: f32[1,512], index: 2, kind: input, shape index: {}]
  %s3 = inlined_call_operand.vmem [shape: f32[1,512], index: 3, kind: input, shape index: {}]
  %s4 = inlined_call_operand.vmem [shape: f32[8,128], index: 4, kind: output, shape index: {}]
  %s5 = sld [smem:[#allocation0]]
  $region34: #{uptask_loss.1} parent=0
    _
  %s7 = ssub.s32 1, %s5
  %s8 = scalar_select 0, %s7, %s5
  // Predicated region
  $region2: #{uptask_loss.1} parent=0 // pred_check
    _
  $region3: #{uptask_loss.1} parent=0 // pred_check_branch
    %10 = sbr.rel (0) target = $region5
  $region4: #{uptask_loss.1} parent=0 // pred_region
    %s11 = sadd.s32 0, 0
    %p12 = scmp.lt.s32.totalorder %s11, 0
    %s13 = scalar_select %p12, %s11, 0
    %s14 = smul.addr %s13, 4
    %s15 = scalar_lea.vmem %s0, %s14
    %s16 = sadd.s32 0, 0
  $region5: #{uptask_loss.1} parent=0 // pred_fallthru
    _
  // Predicated region
  $region6: #{uptask_loss.1} parent=0 // pred_check
    _
  $region7: #{uptask_loss.1} parent=0 // pred_check_branch
    %18 = sbr.rel (0) target = $region9
  $region8: #{uptask_loss.1} parent=0 // pred_region
    %s19 = sadd.s32 0, 0
    %p20 = scmp.lt.s32.totalorder %s19, 0
    %s21 = scalar_select %p20, %s19, 0
    %s22 = smul.addr %s21, 4
    %s23 = scalar_lea.vmem %s1, %s22
    %s24 = sadd.s32 0, 0
  $region9: #{uptask_loss.1} parent=0 // pred_fallthru
    _
  // Predicated region
  $region10: #{uptask_loss.1} parent=0 // pred_check
    _
  $region11: #{uptask_loss.1} parent=0 // pred_check_branch
    %26 = sbr.rel (0) target = $region13
  $region12: #{uptask_loss.1} parent=0 // pred_region
    %s27 = sadd.s32 0, 0
    %p28 = scmp.lt.s32.totalorder %s27, 0
    %s29 = scalar_select %p28, %s27, 0
    %s30 = smul.addr %s29, 4
    %s31 = scalar_lea.vmem %s2, %s30
    %s32 = sadd.s32 0, 0
  $region13: #{uptask_loss.1} parent=0 // pred_fallthru
    _
  // Predicated region
  $region14: #{uptask_loss.1} parent=0 // pred_check
    _
  $region15: #{uptask_loss.1} parent=0 // pred_check_branch
    %34 = sbr.rel (0) target = $region17
  $region16: #{uptask_loss.1} parent=0 // pred_region
    %s35 = sadd.s32 0, 0
    %p36 = scmp.lt.s32.totalorder %s35, 0
    %s37 = scalar_select %p36, %s35, 0
    %s38 = smul.addr %s37, 4
    %s39 = scalar_lea.vmem %s3, %s38
    %s40 = sadd.s32 0, 0
  $region17: #{uptask_loss.1} parent=0 // pred_fallthru
    _
  %s41 = sadd.s32 0, 0
  %p42 = scmp.lt.s32.totalorder %s41, 0
  %s43 = scalar_select %p42, %s41, 0
  %s44 = smul.addr %s43, 4
  %s45 = scalar_lea.vmem %s0, %s44
  %s46 = sadd.s32 0, 0
  %p47 = scmp.lt.s32.totalorder %s46, 0
  %s48 = scalar_select %p47, %s46, 0
  %s49 = smul.addr %s48, 4
  %s50 = scalar_lea.vmem %s1, %s49
  %s51 = sadd.s32 0, 0
  %p52 = scmp.lt.s32.totalorder %s51, 0
  %s53 = scalar_select %p52, %s51, 0
  %s54 = smul.addr %s53, 4
  %s55 = scalar_lea.vmem %s2, %s54
  %s56 = sadd.s32 0, 0
  %p57 = scmp.lt.s32.totalorder %s56, 0
  %s58 = scalar_select %p57, %s56, 0
  %s59 = smul.addr %s58, 4
  %s60 = scalar_lea.vmem %s3, %s59
  %s61 = sadd.s32 0, 0
  %p62 = scmp.lt.s32.totalorder %s61, 0
  %s63 = scalar_select %p62, %s61, 0
  %s64 = smul.addr %s63, 4
  %s65 = scalar_lea.vmem %s0, %s64
  %s66 = sadd.s32 0, 0
  %s67 = sadd.s32 0, 0
  %p68 = scmp.lt.s32.totalorder %s67, 0
  %s69 = scalar_select %p68, %s67, 0
  %s70 = smul.addr %s69, 4
  %s71 = scalar_lea.vmem %s1, %s70
  %s72 = sadd.s32 0, 0
  %s73 = sadd.s32 0, 0
  %p74 = scmp.lt.s32.totalorder %s73, 0
  %s75 = scalar_select %p74, %s73, 0
  %s76 = smul.addr %s75, 4
  %s77 = scalar_lea.vmem %s2, %s76
  %s78 = sadd.s32 0, 0
  %s79 = sadd.s32 0, 0
  %p80 = scmp.lt.s32.totalorder %s79, 0
  %s81 = scalar_select %p80, %s79, 0
  %s82 = smul.addr %s81, 4
  %s83 = scalar_lea.vmem %s3, %s82
  %s84 = sadd.s32 0, 0
  %p85 = scmp.eq.s32.totalorder 0, 0
  // Predicated region
  $region18: #{uptask_loss.1} parent=0 // pred_check
    %p86 = pneg %p85
  $region19: #{uptask_loss.1} parent=0 // pred_check_branch
    %88 = sbr.rel (%p86) target = $region21
  $region20: #{uptask_loss.1} parent=0 // pred_region
    %v89 = vlaneseq
    %vm90 = vcmp.ge.s32.totalorder %v89, 0
    %vm91 = vcmp.lt.s32.totalorder %v89, 512
    %vm92 = vmand %vm90, %vm91
    %93 = vst.msk [vmem:[#allocation2] sm:$0xf] %vm92, 0.0
    %94 = vst.msk [vmem:[#allocation3] sm:$0xf] %vm92, 0.0
    %95 = vst.msk [vmem:[#allocation4] sm:$0xf] %vm92, 0.0
    %96 = vst.msk [vmem:[#allocation5] sm:$0xf] %vm92, 0.0
    %97 = vst.msk [vmem:[#allocation6] sm:$0xf] %vm92, 0.0
  $region21: #{uptask_loss.1} parent=0 // pred_fallthru
    _
  %v98 = vld [vmem:[%s65] sm:$0xf]
  %v99 = vld [vmem:[%s71] sm:$0xf]
  %v100 = vand.u32 2147483647, %v98
  %v101 = vsub.f32 0.0, %v100
  %v102 = vmul.f32 %v101, 1.442695
  %v103 = vpow.pop %v102
  %v104 = vadd.f32 %v103, 1.0
  %v105 = vlog2.pop %v104
  %v106 = vmul.f32 %v105, 0.6931472
  %vm107 = vcmp.ge.f32.partialorder %v98, 0.0
  %v108 = vsel %vm107, 1.0, %v103
  %v109 = vrcp.pop %v104
  %v110 = vmul.f32 %v108, %v109
  %v111 = vmul.f32 %v110, %v99
  %v112 = vmax.f32 %v98, 0.0
  %v113 = vmul.f32 %v98, %v99
  %v114 = vsub.f32 %v112, %v113
  %v115 = vadd.f32 %v114, %v106
  %v116 = vld [vmem:[#allocation2] sm:$0xf]
  %v117 = vadd.f32 %v116, %v111
  %v118 = vlaneseq
  %vm119 = vcmp.ge.s32.totalorder %v118, 0
  %vm120 = vcmp.lt.s32.totalorder %v118, 512
  %vm121 = vmand %vm119, %vm120
  %122 = vst.msk [vmem:[#allocation2] sm:$0xf] %vm121, %v117
  %v123 = vld [vmem:[#allocation3] sm:$0xf]
  %v124 = vadd.f32 %v123, %v110
  %125 = vst.msk [vmem:[#allocation3] sm:$0xf] %vm121, %v124
  %v126 = vld [vmem:[#allocation4] sm:$0xf]
  %v127 = vadd.f32 %v126, %v99
  %128 = vst.msk [vmem:[#allocation4] sm:$0xf] %vm121, %v127
  %v129 = vld [vmem:[#allocation5] sm:$0xf]
  %v130 = vadd.f32 %v129, %v115
  %131 = vst.msk [vmem:[#allocation5] sm:$0xf] %vm121, %v130
  %v132 = vld [vmem:[%s77] sm:$0xf]
  %v133 = vld [vmem:[%s83] sm:$0xf]
  %v134 = vsub.f32 %v132, %v133
  %v135 = vand.u32 2147483647, %v134
  %v136 = vld [vmem:[#allocation6] sm:$0xf]
  %v137 = vadd.f32 %v136, %v135
  %138 = vst.msk [vmem:[#allocation6] sm:$0xf] %vm121, %v137
  // Predicated region
  $region22: #{uptask_loss.1} parent=0 // pred_check
    %p139 = pneg %p85
  $region23: #{uptask_loss.1} parent=0 // pred_check_branch
    %141 = sbr.rel (%p139) target = $region25
  $region24: #{uptask_loss.1} parent=0 // pred_region
    %v142 = vld [vmem:[#allocation2] sm:$0xf]
    %v144 = vlaneseq
    %v145 = vshrl.u32 %v144, 7
    %v146 = vsub.s32 0, %v145
    %v147 = vrot.slane %v142, %v146
    %v148 = vlaneseq
    %v149 = vshrl.u32 %v148, 7
    %v150 = vsub.s32 1, %v149
    %v151 = vrot.slane %v142, %v150
    %v152 = vlaneseq
    %v153 = vshrl.u32 %v152, 7
    %v154 = vsub.s32 2, %v153
    %v155 = vrot.slane %v142, %v154
    %v156 = vlaneseq
    %v157 = vshrl.u32 %v156, 7
    %v158 = vsub.s32 3, %v157
    %v159 = vrot.slane %v142, %v158
    %vm164 = vcmask 1040384
    %v165 = vsel %vm164, %v147, 0.0
    %v166 = vsel %vm164, %v151, 0.0
    %v167 = vadd.f32 %v165, %v166
    %v168 = vsel %vm164, %v155, 0.0
    %v169 = vadd.f32 %v167, %v168
    %v170 = vsel %vm164, %v159, 0.0
    %v171 = vadd.f32 %v169, %v170
    %172 = vadd.xlane.f32.xlu0 %v171
    %v173 = vpop.xlane.xlu0 %172
    %v174 = vrot.slane %v173, 4
    %v175 = vadd.f32 %v173, %v174
    %v176 = vrot.slane %v175, 2
    %v177 = vadd.f32 %v175, %v176
    %v178 = vrot.slane %v177, 1
    %v179 = vadd.f32 %v177, %v178
    %s180 = vtos %v179
    %v181 = vld [vmem:[#allocation3] sm:$0xf]
    %v183 = vlaneseq
    %v184 = vshrl.u32 %v183, 7
    %v185 = vsub.s32 0, %v184
    %v186 = vrot.slane %v181, %v185
    %v187 = vlaneseq
    %v188 = vshrl.u32 %v187, 7
    %v189 = vsub.s32 1, %v188
    %v190 = vrot.slane %v181, %v189
    %v191 = vlaneseq
    %v192 = vshrl.u32 %v191, 7
    %v193 = vsub.s32 2, %v192
    %v194 = vrot.slane %v181, %v193
    %v195 = vlaneseq
    %v196 = vshrl.u32 %v195, 7
    %v197 = vsub.s32 3, %v196
    %v198 = vrot.slane %v181, %v197
    %v203 = vsel %vm164, %v186, 0.0
    %v204 = vsel %vm164, %v190, 0.0
    %v205 = vadd.f32 %v203, %v204
    %v206 = vsel %vm164, %v194, 0.0
    %v207 = vadd.f32 %v205, %v206
    %v208 = vsel %vm164, %v198, 0.0
    %v209 = vadd.f32 %v207, %v208
    %210 = vadd.xlane.f32.xlu0 %v209
    %v211 = vpop.xlane.xlu0 %210
    %v212 = vrot.slane %v211, 4
    %v213 = vadd.f32 %v211, %v212
    %v214 = vrot.slane %v213, 2
    %v215 = vadd.f32 %v213, %v214
    %v216 = vrot.slane %v215, 1
    %v217 = vadd.f32 %v215, %v216
    %s218 = vtos %v217
    %v219 = vld [vmem:[#allocation4] sm:$0xf]
    %v221 = vlaneseq
    %v222 = vshrl.u32 %v221, 7
    %v223 = vsub.s32 0, %v222
    %v224 = vrot.slane %v219, %v223
    %v225 = vlaneseq
    %v226 = vshrl.u32 %v225, 7
    %v227 = vsub.s32 1, %v226
    %v228 = vrot.slane %v219, %v227
    %v229 = vlaneseq
    %v230 = vshrl.u32 %v229, 7
    %v231 = vsub.s32 2, %v230
    %v232 = vrot.slane %v219, %v231
    %v233 = vlaneseq
    %v234 = vshrl.u32 %v233, 7
    %v235 = vsub.s32 3, %v234
    %v236 = vrot.slane %v219, %v235
    %v241 = vsel %vm164, %v224, 0.0
    %v242 = vsel %vm164, %v228, 0.0
    %v243 = vadd.f32 %v241, %v242
    %v244 = vsel %vm164, %v232, 0.0
    %v245 = vadd.f32 %v243, %v244
    %v246 = vsel %vm164, %v236, 0.0
    %v247 = vadd.f32 %v245, %v246
    %248 = vadd.xlane.f32.xlu0 %v247
    %v249 = vpop.xlane.xlu0 %248
    %v250 = vrot.slane %v249, 4
    %v251 = vadd.f32 %v249, %v250
    %v252 = vrot.slane %v251, 2
    %v253 = vadd.f32 %v251, %v252
    %v254 = vrot.slane %v253, 1
    %v255 = vadd.f32 %v253, %v254
    %s256 = vtos %v255
    %v257 = vld [vmem:[#allocation5] sm:$0xf]
    %v259 = vlaneseq
    %v260 = vshrl.u32 %v259, 7
    %v261 = vsub.s32 0, %v260
    %v262 = vrot.slane %v257, %v261
    %v263 = vlaneseq
    %v264 = vshrl.u32 %v263, 7
    %v265 = vsub.s32 1, %v264
    %v266 = vrot.slane %v257, %v265
    %v267 = vlaneseq
    %v268 = vshrl.u32 %v267, 7
    %v269 = vsub.s32 2, %v268
    %v270 = vrot.slane %v257, %v269
    %v271 = vlaneseq
    %v272 = vshrl.u32 %v271, 7
    %v273 = vsub.s32 3, %v272
    %v274 = vrot.slane %v257, %v273
    %v279 = vsel %vm164, %v262, 0.0
    %v280 = vsel %vm164, %v266, 0.0
    %v281 = vadd.f32 %v279, %v280
    %v282 = vsel %vm164, %v270, 0.0
    %v283 = vadd.f32 %v281, %v282
    %v284 = vsel %vm164, %v274, 0.0
    %v285 = vadd.f32 %v283, %v284
    %286 = vadd.xlane.f32.xlu0 %v285
    %v287 = vpop.xlane.xlu0 %286
    %v288 = vrot.slane %v287, 4
    %v289 = vadd.f32 %v287, %v288
    %v290 = vrot.slane %v289, 2
    %v291 = vadd.f32 %v289, %v290
    %v292 = vrot.slane %v291, 1
    %v293 = vadd.f32 %v291, %v292
    %s294 = vtos %v293
    %v295 = vld [vmem:[#allocation6] sm:$0xf]
    %v297 = vlaneseq
    %v298 = vshrl.u32 %v297, 7
    %v299 = vsub.s32 0, %v298
    %v300 = vrot.slane %v295, %v299
    %v301 = vlaneseq
    %v302 = vshrl.u32 %v301, 7
    %v303 = vsub.s32 1, %v302
    %v304 = vrot.slane %v295, %v303
    %v305 = vlaneseq
    %v306 = vshrl.u32 %v305, 7
    %v307 = vsub.s32 2, %v306
    %v308 = vrot.slane %v295, %v307
    %v309 = vlaneseq
    %v310 = vshrl.u32 %v309, 7
    %v311 = vsub.s32 3, %v310
    %v312 = vrot.slane %v295, %v311
    %v317 = vsel %vm164, %v300, 0.0
    %v318 = vsel %vm164, %v304, 0.0
    %v319 = vadd.f32 %v317, %v318
    %v320 = vsel %vm164, %v308, 0.0
    %v321 = vadd.f32 %v319, %v320
    %v322 = vsel %vm164, %v312, 0.0
    %v323 = vadd.f32 %v321, %v322
    %324 = vadd.xlane.f32.xlu0 %v323
    %v325 = vpop.xlane.xlu0 %324
    %v326 = vrot.slane %v325, 4
    %v327 = vadd.f32 %v325, %v326
    %v328 = vrot.slane %v327, 2
    %v329 = vadd.f32 %v327, %v328
    %v330 = vrot.slane %v329, 1
    %v331 = vadd.f32 %v329, %v330
    %s332 = vtos %v331
    %v333 = vlaneseq
    %v334 = vshrl.u32 %v333, 7
    %vm335 = vcmp.eq.s32.totalorder %v334, 0
    %v336 = vstv %s180
    %v337 = vsel %vm335, %v336, 0.0
    %vm338 = vcmp.eq.s32.totalorder %v334, 1
    %v339 = vstv %s218
    %v340 = vsel %vm338, %v339, %v337
    %vm341 = vcmp.eq.s32.totalorder %v334, 2
    %v342 = vstv %s256
    %v343 = vsel %vm341, %v342, %v340
    %vm344 = vcmp.eq.s32.totalorder %v334, 3
    %v345 = vstv %s294
    %v346 = vsel %vm344, %v345, %v343
    %vm347 = vcmp.eq.s32.totalorder %v334, 4
    %v348 = vstv %s332
    %v349 = vsel %vm347, %v348, %v346
    %350 = vst [vmem:[%s4] sm:$0xff] %v349
  $region25: #{uptask_loss.1} parent=0 // pred_fallthru
    _
  // Predicated region
  $region26: #{uptask_loss.1} parent=0 // pred_check
    _
  $region27: #{uptask_loss.1} parent=0 // pred_check_branch
    %352 = sbr.rel (0) target = $region29
  $region28: #{uptask_loss.1} parent=0 // pred_region
    _
  $region29: #{uptask_loss.1} parent=0 // pred_fallthru
    _
  // Predicated region
  $region30: #{uptask_loss.1} parent=0 // pred_check
    _
  $region31: #{uptask_loss.1} parent=0 // pred_check_branch
    %354 = sbr.rel (0) target = $region33
  $region32: #{uptask_loss.1} parent=0 // pred_region
    _
  $region33: #{uptask_loss.1} parent=0 // pred_fallthru
    _

</llo_original>
